<compile_context>
chip_gen: v5e
topology: v5e:2x2
jax: 0.10.0
libtpu: 0.0.40
codegen_flags: <defaults>
</compile_context>

<pallas_src>
import functools

import jax
import jax.numpy as jnp
from jax import lax
from jax.experimental import pallas as pl
from jax.experimental.pallas import tpu as pltpu


# ------------------------------- tiling utils -------------------------------


def _round_up(x, m):
    return ((x + m - 1) // m) * m


def _choose_k_tiling(m_pad, k, dtype_bytes, block_k=None,
                     target_bytes=8 << 20, max_tk=1 << 15):
    """Pick a lane-aligned (multiple of 128) K tile and the padded K it divides.

    The tile is sized so each streamed feature buffer is ~target_bytes
    (fewer, larger grid steps amortize the ~0.35us/step overhead and the
    (M, M) accumulator read-modify-write) while keeping zero-padding waste
    below one 128-lane slab per step.
    """
    k_pad128 = _round_up(max(k, 1), 128)
    if block_k is not None:
        tk_target = _round_up(int(block_k), 128)
    else:
        tk_target = (target_bytes // max(m_pad * dtype_bytes, 1)) // 128 * 128
        tk_target = max(128, min(tk_target, max_tk))
    tk_target = max(128, min(tk_target, k_pad128))
    nsteps = -(-k_pad128 // tk_target)                 # ceil div
    tk = _round_up(-(-k_pad128 // nsteps), 128)        # minimize padding waste
    return tk, tk * nsteps


def _vmem_limit_bytes(required_bytes):
    """Generation-aware VMEM cap: enough for our buffers, headroom for Mosaic."""
    try:
        cap = pltpu.get_tpu_info().vmem_capacity_bytes
    except Exception:
        cap = 64 * 1024 * 1024  # conservative: v7x per-TensorCore VMEM
    limit = max(int(required_bytes) + (4 << 20), 16 << 20)
    return int(min(limit, (cap * 3) // 4))


# ----------------------------- Pallas kernel --------------------------------


def _gram_kernel(f_ref, g_ref, *, inv_total):
    # grid = (K_pad // tk,)  ["arbitrary" reduction axis]
    # f_ref: (M_pad, tk) feature tile (bf16 or f32)
    # g_ref: (M_pad, M_pad) f32 output, resident across the K axis
    #        (index_map ignores the step) -> used directly as the accumulator.
    k = pl.program_id(0)

    @pl.when(k == 0)
    def _():
        g_ref[...] = jnp.zeros_like(g_ref)

    f = f_ref[...]
    # F_tile @ F_tile^T expressed as a contraction over axis 1 of both
    # operands (no materialized transpose, f32 MXU accumulation).
    g_ref[...] += lax.dot_general(
        f,
        f,
        dimension_numbers=(((1,), (1,)), ((), ())),
        preferred_element_type=jnp.float32,
    )

    @pl.when(k == pl.num_programs(0) - 1)
    def _():
        g_ref[...] = g_ref[...] * inv_total


# ------------------------------ JAX wrappers --------------------------------


def gram_matrix(x, *, block_k=None, compute_dtype=jnp.bfloat16,
                out_dtype=jnp.float32, buffer_count=None):
    """Pallas gram matrix for NCHW input x: (F @ F.T) / (a*b*c*d).

    compute_dtype: MXU operand dtype (accumulation is always f32).  bfloat16
      (default) halves HBM traffic and hits the bf16 MXU rate on v5e/v6e/v7x;
      pass jnp.float32 to match the PyTorch reference bit-for-bit-ish.
    buffer_count: optional pipeline depth (>2) for the streamed feature tiles,
      useful only if profiling shows exposed DMA at the chosen tile size.
    """
    a, b, c, d = x.shape
    m, k = a * b, c * d
    inv_total = 1.0 / float(a * b * c * d)

    features = x.reshape(m, k).astype(compute_dtype)
    dtype_bytes = jnp.dtype(compute_dtype).itemsize

    m_pad = _round_up(max(m, 1), 8)               # sublane alignment
    tk, k_pad = _choose_k_tiling(m_pad, k, dtype_bytes, block_k)
    nsteps = k_pad // tk

    if (m_pad, k_pad) != (m, k):
        # Zero rows/columns do not change F @ F^T; keeps tiles lane-aligned
        # (unmasked vst) and bounded regardless of odd spatial sizes.
        features = jnp.pad(features, ((0, m_pad - m), (0, k_pad - k)))

    feat_spec_kwargs = {}
    if buffer_count is not None and buffer_count > 2:
        feat_spec_kwargs["pipeline_mode"] = pl.Buffered(buffer_count)
    feat_spec = pl.BlockSpec((m_pad, tk), lambda kk: (0, kk), **feat_spec_kwargs)

    # double-buffered feature stream + (conservatively) double-counted output
    vmem_need = 2 * m_pad * tk * dtype_bytes + 2 * m_pad * m_pad * 4

    g_pad = pl.pallas_call(
        functools.partial(_gram_kernel, inv_total=inv_total),
        out_shape=jax.ShapeDtypeStruct((m_pad, m_pad), jnp.float32),
        grid_spec=pltpu.PrefetchScalarGridSpec(
            num_scalar_prefetch=0,
            grid=(nsteps,),
            in_specs=[feat_spec],
            out_specs=pl.BlockSpec((m_pad, m_pad), lambda kk: (0, 0)),
        ),
        compiler_params=pltpu.CompilerParams(
            dimension_semantics=("arbitrary",),
            vmem_limit_bytes=_vmem_limit_bytes(vmem_need),
        ),
    )(features)

    g = g_pad if m_pad == m else g_pad[:m, :m]
    return g.astype(out_dtype)


class StyleLoss:
    """JAX/Pallas port of the PyTorch StyleLoss module."""

    def __init__(self, target_feature, *, block_k=None,
                 compute_dtype=jnp.bfloat16):
        self.block_k = block_k
        self.compute_dtype = compute_dtype
        # Target gram is computed once and treated as a detached constant.
        self.target = jax.lax.stop_gradient(
            gram_matrix(target_feature, block_k=block_k,
                        compute_dtype=compute_dtype)
        )
        self.loss = None

    def __call__(self, x):
        g = gram_matrix(x, block_k=self.block_k,
                        compute_dtype=self.compute_dtype)
        # The MSE over the tiny (M, M) gram is left to XLA (per perf review):
        # it frees the target gram / scratch from kernel VMEM and its cost is
        # negligible next to the K-streamed matmul above.
        diff = g - self.target
        self.loss = jnp.mean(diff * diff)
        # Module returns its input unchanged (transparent loss layer).
        return x


# ------------------------------ reference check -----------------------------


def _gram_ref(x):
    a, b, c, d = x.shape
    f = x.reshape(a * b, c * d).astype(jnp.float32)
    return (f @ f.T) / (a * b * c * d)


if __name__ == "__main__":
    key = jax.random.PRNGKey(0)
    k_t, k_x, k_u = jax.random.split(key, 3)

    # small NCHW shapes: batch=2, channels=4, spatial=16  -> M=8, K=256
    target_feature = jax.random.normal(k_t, (2, 4, 16, 16), dtype=jnp.float32)
    x = jax.random.normal(k_x, (2, 4, 16, 16), dtype=jnp.float32)

    g_ref = _gram_ref(x)
    t_ref = _gram_ref(target_feature)
    loss_ref = jnp.mean((g_ref - t_ref) ** 2)

    # --- f32 operands: matches the PyTorch reference numerics ---------------
    # block_k=128 forces the multi-step K accumulation (K=256 -> 2 grid steps).
    module_f32 = StyleLoss(target_feature, block_k=128,
                           compute_dtype=jnp.float32)
    out = jax.block_until_ready(module_f32(x))
    loss_f32 = jax.block_until_ready(module_f32.loss)

    g_pallas = jax.block_until_ready(
        gram_matrix(x, block_k=128, compute_dtype=jnp.float32))

    assert jnp.allclose(out, x), "forward must return input unchanged"
    assert jnp.allclose(g_pallas, g_ref, rtol=1e-5, atol=1e-6), "gram mismatch"
    assert jnp.allclose(loss_f32, loss_ref, rtol=1e-5, atol=1e-6), (
        loss_f32, loss_ref)

    # --- bf16 operands (default): f32 accumulation, looser tolerance --------
    module_bf16 = StyleLoss(target_feature, block_k=128)
    _ = jax.block_until_ready(module_bf16(x))
    loss_bf16 = jax.block_until_ready(module_bf16.loss)
    assert jnp.isfinite(loss_bf16)
    assert jnp.allclose(loss_bf16, loss_ref, rtol=0.25, atol=1e-5), (
        loss_bf16, loss_ref)

    # --- unaligned shape exercises the zero-padding path (M=3, K=100) -------
    u = jax.random.normal(k_u, (1, 3, 10, 10), dtype=jnp.float32)
    g_u = jax.block_until_ready(gram_matrix(u, compute_dtype=jnp.float32))
    assert g_u.shape == (3, 3)
    assert jnp.allclose(g_u, _gram_ref(u), rtol=1e-5, atol=1e-6), "padded gram"

    print("KERNEL_OK")
</pallas_src>

<mosaic_0001>
module attributes {stable_mosaic.version = 11 : i64} {
  func.func @_gram_kernel(%arg0: i32, %arg1: memref<8x128xf32, #tpu.memory_space<vmem>>, %arg2: memref<8x8xf32, #tpu.memory_space<vmem>>) attributes {dimension_semantics = [#tpu.dimension_semantics<arbitrary>], iteration_bounds = array<i64: 2>, scalar_prefetch = 0 : i64, scratch_operands = 0 : i64, tpu.core_type = #tpu.core_type<tc>, window_params = [{transform_indices = @transform_0, window_bounds = array<i64: 8, 128>}, {pipeline_mode = #tpu.pipeline_mode<synchronous>, transform_indices = @transform_1, window_bounds = array<i64: 8, 8>}]} {
    %c0_i32 = arith.constant 0 : i32
    %0 = arith.cmpi eq, %arg0, %c0_i32 : i32
    %1 = arith.extui %0 : i1 to i32
    %c0_i32_0 = arith.constant 0 : i32
    %2 = arith.cmpi ne, %1, %c0_i32_0 : i32
    scf.if %2 {
      %cst_7 = arith.constant 0.000000e+00 : f32
      %11 = vector.broadcast %cst_7 : f32 to vector<8x8xf32>
      %c0_8 = arith.constant 0 : index
      %c0_9 = arith.constant 0 : index
      %12 = vector.load %arg2[%c0_8, %c0_9] : memref<8x8xf32, #tpu.memory_space<vmem>>, vector<8x8xf32>
      tpu.vector_store %arg2[%c0_8, %c0_9], %11 {strides = array<i32>} : memref<8x8xf32, #tpu.memory_space<vmem>>, vector<8x8xf32>,
    } else {
    }
    %c0 = arith.constant 0 : index
    %c0_1 = arith.constant 0 : index
    %3 = vector.load %arg1[%c0, %c0_1] : memref<8x128xf32, #tpu.memory_space<vmem>>, vector<8x128xf32>
    %c0_2 = arith.constant 0 : index
    %c0_3 = arith.constant 0 : index
    %4 = vector.load %arg2[%c0_2, %c0_3] : memref<8x8xf32, #tpu.memory_space<vmem>>, vector<8x8xf32>
    %cst = arith.constant dense<0.000000e+00> : vector<8x8xf32>
    %5 = tpu.matmul %3, %3, %cst {dimension_numbers = #tpu.dot_dimension_numbers<[1], [1], [0], [0], [0, 0, 1, 0], [], []>} : vector<8x128xf32>, vector<8x128xf32>, vector<8x8xf32> -> vector<8x8xf32>
    %6 = arith.addf %4, %5 : vector<8x8xf32>
    %c0_4 = arith.constant 0 : index
    %c0_5 = arith.constant 0 : index
    %7 = vector.load %arg2[%c0_4, %c0_5] : memref<8x8xf32, #tpu.memory_space<vmem>>, vector<8x8xf32>
    tpu.vector_store %arg2[%c0_4, %c0_5], %6 {strides = array<i32>} : memref<8x8xf32, #tpu.memory_space<vmem>>, vector<8x8xf32>,
    %c1_i32 = arith.constant 1 : i32
    %8 = arith.cmpi eq, %arg0, %c1_i32 : i32
    %9 = arith.extui %8 : i1 to i32
    %c0_i32_6 = arith.constant 0 : i32
    %10 = arith.cmpi ne, %9, %c0_i32_6 : i32
    scf.if %10 {
      %c0_7 = arith.constant 0 : index
      %c0_8 = arith.constant 0 : index
      %11 = vector.load %arg2[%c0_7, %c0_8] : memref<8x8xf32, #tpu.memory_space<vmem>>, vector<8x8xf32>
      %cst_9 = arith.constant 4.8828125E-4 : f32
      %12 = vector.broadcast %cst_9 : f32 to vector<8x8xf32>
      %13 = arith.mulf %11, %12 : vector<8x8xf32>
      %c0_10 = arith.constant 0 : index
      %c0_11 = arith.constant 0 : index
      %14 = vector.load %arg2[%c0_10, %c0_11] : memref<8x8xf32, #tpu.memory_space<vmem>>, vector<8x8xf32>
      tpu.vector_store %arg2[%c0_10, %c0_11], %13 {strides = array<i32>} : memref<8x8xf32, #tpu.memory_space<vmem>>, vector<8x8xf32>,
    } else {
    }
    return
  }
  func.func @transform_0(%arg0: i32) -> (i32, i32) {
    %c0_i32 = arith.constant 0 : i32
    %c0_i32_0 = arith.constant 0 : i32
    return %c0_i32, %arg0 : i32, i32
  }
  func.func @transform_1(%arg0: i32) -> (i32, i32) {
    %c0_i32 = arith.constant 0 : i32
    %c0_i32_0 = arith.constant 0 : i32
    %c0_i32_1 = arith.constant 0 : i32
    return %c0_i32, %c0_i32_0 : i32, i32
  }
}

</mosaic_0001>

<llo_original>
// kernel: tpu_custom_call.1
$region0: #{tpu_custom_call.1}
  #allocation0 [shape = 'u32[]', space=smem, size = 0x4, offset = 0x4, fixed_abs, tag = 'smem constant byte address 0x4 - core index']
  #allocation1 [shape = 'u32[72,128]{1,0:T(1,128)}', space=vmem, size = 0x9000, scoped, tag = 'internal scratch']
  %s0 = inlined_call_operand.hbm [shape: f32[8,256], index: 0, kind: input, shape index: {}]
  %s1 = inlined_call_operand.hbm [shape: f32[8,8], index: 1, kind: output, shape index: {}]
  %s2 = sld [smem:[#allocation0]]
  $region49: #{tpu_custom_call.1} parent=0
    _
  %s4 = ssub.s32 1, %s2
  %s5 = scalar_select 0, %s4, %s2
  $region1: #{tpu_custom_call.1} parent=0
    #allocation2 [shape = 'u8[8192]{0}', space=vmem, size = 0x2000, scoped, tag = 'input window, operand 0']
    #allocation3 [shape = 's32[2]{0}', space=sflag, size = 0x8, scoped, tag = 'scoped memory for tpu_custom_call.1']
    #allocation4 [shape = 's32[2]{0}', space=sflag, size = 0x8, scoped, tag = 'scoped memory for tpu_custom_call.1']
    #allocation5 [shape = 'u8[4096]{0}', space=vmem, size = 0x1000, scoped, tag = 'output window, operand 0, single buffered']
    %6 = vsyncpa [#allocation3], 0
    %s7 = scalar_lea.sflag [#allocation3], 1
    %8 = vsyncpa %s7, 0
    %9 = vsyncpa [#allocation4], 0
    loop: start=0, step=1, limit=4
    $region2: #{tpu_custom_call.1} parent=1 // loop_pre_header
      _
    $region3: #{tpu_custom_call.1} parent=1 // loop_header
      %s11 = sphi 0, %s15
      %p12 = scmp.ge.s32.totalorder %s11, 4
      %s21 = sphi 0, %s23
      %s24 = sphi 0, %s21
      %s25 = sphi 0, %s24
      %s41 = sphi 0, %s25
      %s45 = sphi 0, %s45
      %s47 = sphi 0, %s45
      %s48 = sphi 0, %s47
      %s62 = sphi 0, %s48
    $region4: #{tpu_custom_call.1} parent=1 // loop_header_branch
      %14 = sbr.rel (%p12) target = $region8
    $region5: #{tpu_custom_call.1} parent=1 // loop_body
      %s16 = ssub.s32 %s11, 1
      %s17 = ssub.s32 %s11, 2
      %s18 = sadd.s32 %s11, 1
      %s19 = ssub.s32 %s11, %s18
      %p20 = scmp.eq.s32.totalorder %s19, 0
      %s22 = sadd.s32 %s21, 1
      %s23 = scalar_select %p20, %s21, %s22
      %p26 = pneg %p20
      %p27 = scmp.eq.s32.totalorder %s11, 1
      %p28 = por %p26, %p27
      %p29 = scmp.ne.s32.totalorder %s21, %s24
      %p30 = scmp.eq.s32.totalorder %s11, 0
      %p31 = por %p29, %p30
      %p32 = scmp.ne.s32.totalorder %s21, %s24
      %p33 = scmp.eq.s32.totalorder %s16, 1
      %p34 = por %p32, %p33
      %p35 = scmp.ne.s32.totalorder %s24, %s25
      %p36 = scmp.eq.s32.totalorder %s16, 0
      %p37 = por %p35, %p36
      %p38 = scmp.ne.s32.totalorder %s24, %s25
      %p39 = scmp.eq.s32.totalorder %s17, 1
      %p40 = por %p38, %p39
      %p42 = scmp.ne.s32.totalorder %s25, %s41
      %p43 = scmp.eq.s32.totalorder %s17, 0
      %p44 = por %p42, %p43
      %s46 = sadd.s32 %s45, 1
      %p49 = scmp.eq.s32.totalorder %s11, 1
      %p50 = scmp.ne.s32.totalorder %s45, %s47
      %p51 = scmp.eq.s32.totalorder %s11, 0
      %p52 = por %p50, %p51
      %p53 = scmp.ne.s32.totalorder %s45, %s47
      %p54 = scmp.eq.s32.totalorder %s16, 1
      %p55 = por %p53, %p54
      %p56 = scmp.ne.s32.totalorder %s47, %s48
      %p57 = scmp.eq.s32.totalorder %s16, 0
      %p58 = por %p56, %p57
      %p59 = scmp.ne.s32.totalorder %s47, %s48
      %p60 = scmp.eq.s32.totalorder %s17, 1
      %p61 = por %p59, %p60
      %p63 = scmp.ne.s32.totalorder %s48, %s62
      %p64 = scmp.eq.s32.totalorder %s17, 0
      %p65 = por %p63, %p64
      %p66 = scmp.le.s32.totalorder 1, %s11
      %p67 = scmp.lt.s32.totalorder %s11, 3
      %p68 = pnand %p66, %p67
      %p69 = pneg %p68
      // Predicated region
      $region9: #{tpu_custom_call.1} parent=5 // pred_check
        _
      $region10: #{tpu_custom_call.1} parent=5 // pred_check_branch
        %71 = sbr.rel (%p68) target = $region12
      $region11: #{tpu_custom_call.1} parent=5 // pred_region
        %s72 = ssub.s32 %s11, 1
      $region12: #{tpu_custom_call.1} parent=5 // pred_fallthru
        _
      %p73 = scmp.lt.s32.totalorder %s11, 2
      // Predicated region
      $region13: #{tpu_custom_call.1} parent=5 // pred_check
        %p74 = pneg %p73
      $region14: #{tpu_custom_call.1} parent=5 // pred_check_branch
        %76 = sbr.rel (%p74) target = $region16
      $region15: #{tpu_custom_call.1} parent=5 // pred_region
        // Predicated region
        $region17: #{tpu_custom_call.1} parent=15 // pred_check
          %p77 = pneg %p31
        $region18: #{tpu_custom_call.1} parent=15 // pred_check_branch
          %79 = sbr.rel (%p77) target = $region20
        $region19: #{tpu_custom_call.1} parent=15 // pred_region
          %s80 = sand.u32 %s21, 1
          %s81 = scalar_lea.sflag [#allocation3], %s80
          %s82 = sand.u32 %s21, 1
          %s83 = smul.addr %s82, 8
          %s84 = scalar_lea.vmem [#allocation2], %s83
          %86 = vsyncadd %s81, 0
          %s87 = smul.addr %s11, 8
          %s88 = scalar_lea.hbm %s0, %s87
          %s90 = sshll.u32 %s88, 4
          %s91 = int_to_ptr.hbm [resolvable:$true] %s90
          %s92 = sshll.u32 %s84, 4
          %s93 = int_to_ptr.vmem [resolvable:$true] %s92
          %95 = dma.hbm_to_vmem [thread:$0]  %s91, 128, %s93, %s81
        $region20: #{tpu_custom_call.1} parent=15 // pred_fallthru
          _
      $region16: #{tpu_custom_call.1} parent=5 // pred_fallthru
        _
      %p96 = scmp.le.s32.totalorder 1, %s11
      %p97 = scmp.lt.s32.totalorder %s11, 3
      %p98 = pnand %p96, %p97
      %p99 = pneg %p98
      // Predicated region
      $region21: #{tpu_custom_call.1} parent=5 // pred_check
        _
      $region22: #{tpu_custom_call.1} parent=5 // pred_check_branch
        %101 = sbr.rel (%p98) target = $region24
      $region23: #{tpu_custom_call.1} parent=5 // pred_region
        %s102 = ssub.s32 %s11, 1
        %s103 = sand.u32 %s24, 1
        %s104 = scalar_lea.sflag [#allocation3], %s103
        %s105 = sand.u32 %s24, 1
        %s106 = smul.addr %s105, 8
        %s107 = scalar_lea.vmem [#allocation2], %s106
        // Predicated region
        $region25: #{tpu_custom_call.1} parent=23 // pred_check
          %p108 = pneg %p37
        $region26: #{tpu_custom_call.1} parent=23 // pred_check_branch
          %110 = sbr.rel (%p108) target = $region28
        $region27: #{tpu_custom_call.1} parent=23 // pred_region
          %112 = dma.done %s104, 128
        $region28: #{tpu_custom_call.1} parent=23 // pred_fallthru
          _
        %s113 = sand.u32 %s24, 1
        %s114 = scalar_lea.sflag [#allocation3], %s113
        %s115 = sand.u32 %s24, 1
        %s116 = smul.addr %s115, 8
        %s117 = scalar_lea.vmem [#allocation2], %s116
        %p118 = pneg %p37
        %p119 = pneg %p34
        %p120 = pneg %p58
        %p121 = pneg %p55
        %p122 = scmp.eq.s32.totalorder %s16, 0
        // Predicated region
        $region29: #{tpu_custom_call.1} parent=23 // pred_check
          %p123 = pneg %p122
        $region30: #{tpu_custom_call.1} parent=23 // pred_check_branch
          %125 = sbr.rel (%p123) target = $region32
        $region31: #{tpu_custom_call.1} parent=23 // pred_region
          %vm126 = vcmask 64512
          %127 = vst.msk [vmem:[#allocation5] sm:$0xff] %vm126, 0.0
        $region32: #{tpu_custom_call.1} parent=23 // pred_fallthru
          _
        %v128 = vld [vmem:[%s107] sm:$0xff]
        %v129 = vld [vmem:[#allocation5] sm:$0xff]
        %130 = vmatpush.xpose.msra.mxu0 0.0
        %131 = vmatpush.xpose.msra.mxu0 0.0
        %132 = vmatpush.xpose.msra.mxu0 0.0
        %133 = vmatpush.xpose.msra.mxu0 0.0
        %134 = vmatpush.xpose.msra.mxu0 0.0
        %135 = vmatpush.xpose.msra.mxu0 0.0
        %136 = vmatpush.xpose.msra.mxu0 0.0
        %137 = vmatpush.xpose.msra.mxu0 0.0
        %138 = vmatpush.xpose.msra.mxu0 0.0
        %139 = vmatpush.xpose.msra.mxu0 0.0
        %140 = vmatpush.xpose.msra.mxu0 0.0
        %141 = vmatpush.xpose.msra.mxu0 0.0
        %142 = vmatpush.xpose.msra.mxu0 0.0
        %143 = vmatpush.xpose.msra.mxu0 0.0
        %144 = vmatpush.xpose.msra.mxu0 0.0
        %145 = vmatpush.xpose.msra.mxu0 %v128
        %146 = vmatmul.f32.gmra.mxu0 %v128
        %v147 = vpop.f32.mrf.mxu0
        %v148 = vadd.f32 0.0, %v147
        %149 = vdwg.mxu0
        %v150 = vadd.f32 %v129, %v148
        %vm151 = vcmask 64512
        %152 = vst.msk [vmem:[#allocation5] sm:$0xff] %vm151, %v150
        %p153 = scmp.eq.s32.totalorder %s16, 1
        // Predicated region
        $region33: #{tpu_custom_call.1} parent=23 // pred_check
          %p154 = pneg %p153
        $region34: #{tpu_custom_call.1} parent=23 // pred_check_branch
          %156 = sbr.rel (%p154) target = $region36
        $region35: #{tpu_custom_call.1} parent=23 // pred_region
          %v157 = vld [vmem:[#allocation5] sm:$0xff]
          %v158 = vmul.f32 %v157, 0.00048828125
          %159 = vst.msk [vmem:[#allocation5] sm:$0xff] %vm151, %v158
        $region36: #{tpu_custom_call.1} parent=23 // pred_fallthru
          _
        // Predicated region
        $region37: #{tpu_custom_call.1} parent=23 // pred_check
          %p160 = pneg %p55
        $region38: #{tpu_custom_call.1} parent=23 // pred_check_branch
          %162 = sbr.rel (%p160) target = $region40
        $region39: #{tpu_custom_call.1} parent=23 // pred_region
          %164 = vsyncadd [#allocation4], 0
          %s166 = sshll.u32 [#allocation5], 4
          %s167 = int_to_ptr.vmem [resolvable:$true] %s166
          %s168 = sshll.u32 %s1, 4
          %s169 = int_to_ptr.hbm [resolvable:$true] %s168
          %171 = dma.vmem_to_hbm [thread:$0]  %s167, 128, %s169, [#allocation4]
        $region40: #{tpu_custom_call.1} parent=23 // pred_fallthru
          _
        // Predicated region
        $region41: #{tpu_custom_call.1} parent=23 // pred_check
          %p172 = pneg %p55
        $region42: #{tpu_custom_call.1} parent=23 // pred_check_branch
          %174 = sbr.rel (%p172) target = $region44
        $region43: #{tpu_custom_call.1} parent=23 // pred_region
          %176 = dma.done [#allocation4], 128
        $region44: #{tpu_custom_call.1} parent=23 // pred_fallthru
          _
      $region24: #{tpu_custom_call.1} parent=5 // pred_fallthru
        _
      %p177 = scmp.le.s32.totalorder 2, %s11
      // Predicated region
      $region45: #{tpu_custom_call.1} parent=5 // pred_check
        %p178 = pneg %p177
      $region46: #{tpu_custom_call.1} parent=5 // pred_check_branch
        %180 = sbr.rel (%p178) target = $region48
      $region47: #{tpu_custom_call.1} parent=5 // pred_region
        %s181 = ssub.s32 %s11, 2
      $region48: #{tpu_custom_call.1} parent=5 // pred_fallthru
        _
    $region6: #{tpu_custom_call.1} parent=1 // loop_footer
      %s15 = sadd.s32 1, %s11
    $region7: #{tpu_custom_call.1} parent=1 // loop_footer_branch
      %10 = sbr.rel target = $region3
    $region8: #{tpu_custom_call.1} parent=1 // loop_exit
      _
    %182 = vsyncpa [#allocation3], 1
    %s183 = scalar_lea.sflag [#allocation3], 1
    %184 = vsyncpa %s183, 1
    %185 = vsyncpa [#allocation4], 1
    %s186 = scalar_lea.sflag [#allocation4], 1
    %187 = vsyncpa %s186, 1

</llo_original>
